<compile_context>
chip_gen: v6e
topology: v6e:2x2x1
jax: 0.10.0
libtpu: 0.0.40
codegen_flags: <defaults>
</compile_context>

<pallas_src>
from typing import NamedTuple

import jax
import jax.numpy as jnp
from jax.experimental import pallas as pl
from jax.experimental.pallas import tpu as pltpu

LANES = 128


def _round_up(x, m):
    return ((x + m - 1) // m) * m


def _cdiv(a, b):
    return -(-a // b)


# ----------------------------------------------------------------------------- kernel
def basemodel_kernel(ids_ref, invlen_ref, embw1_ref, b1_ref, w2_ref, b2_ref, out_ref):
    ids = ids_ref[...]                       # [TB, S] int32
    tb, seq = ids.shape
    v_pad = embw1_ref.shape[0]

    # ---- fused embedding lookup + sum pooling via one-hot counts -------------------
    # counts[b, v] = #occurrences of token v in sentence b, accumulated in int32.
    # Padding token 0 hits the all-zero row 0 of emb_w1 (padding_idx=0), so it
    # contributes nothing; padded vocab rows [V, v_pad) are also zero.
    vocab_iota = jax.lax.broadcasted_iota(jnp.int32, (tb, v_pad), 1)
    counts = jnp.zeros((tb, v_pad), jnp.int32)
    for s in range(seq):                     # static unroll; S is small here
        counts = counts + (ids[:, s:s + 1] == vocab_iota).astype(jnp.int32)
    # TODO(synk): for S >> 16 switch to lax.fori_loop(..., unroll=True); for large V
    # tile the vocab axis (extra "arbitrary" grid axis + f32 accumulator scratch) or
    # use a scalar-prefetch DMA gather instead of the one-hot counts matmul.

    # ---- fused (mean-pool o Linear1): h = (counts @ (emb @ W1)) / len + b1 ---------
    h = jnp.dot(counts.astype(jnp.bfloat16), embw1_ref[...],
                preferred_element_type=jnp.float32)          # [TB, H] f32 accum
    h = h * invlen_ref[...] + b1_ref[...]                    # 1/len applied post-matmul
    h = jnp.maximum(h, 0.0)                                  # ReLU (Dropout = identity)

    # ---- output layer: Linear + Sigmoid (columns lane-padded to 128) ---------------
    logits = jnp.dot(h.astype(jnp.bfloat16), w2_ref[...],
                     preferred_element_type=jnp.float32) + b2_ref[...]
    out_ref[...] = jax.nn.sigmoid(logits)


# --------------------------------------------------------------------------- params
def xavier_uniform(key, fan_in, fan_out, shape):
    bound = (6.0 / (fan_in + fan_out)) ** 0.5
    return jax.random.uniform(key, shape, jnp.float32, -bound, bound)


def init_params(key, vocab_size, embedding_size, mlp_hidden, output_classes):
    k_emb, k_w1, k_w2 = jax.random.split(key, 3)
    emb_table = xavier_uniform(k_emb, vocab_size, embedding_size,
                               (vocab_size, embedding_size))
    emb_table = emb_table.at[0].set(0.0)      # padding_idx=0
    w1 = xavier_uniform(k_w1, embedding_size, mlp_hidden,
                        (embedding_size, mlp_hidden))
    b1 = jnp.zeros((mlp_hidden,), jnp.float32)
    w2 = xavier_uniform(k_w2, mlp_hidden, output_classes,
                        (mlp_hidden, output_classes))
    b2 = jnp.zeros((output_classes,), jnp.float32)
    return emb_table, w1, b1, w2, b2


class PreparedParams(NamedTuple):
    emb_w1: jax.Array    # [v_pad, H] bf16  (emb_table @ W1, vocab lane-padded)
    b1: jax.Array        # [1, H]     f32
    w2: jax.Array        # [H, c_pad] bf16  (output columns lane-padded)
    b2: jax.Array        # [1, c_pad] f32
    n_classes: int


def prepare_params(params, mxu_dtype=jnp.bfloat16):
    """One-time layout plumbing: W1 fusion, lane padding, bf16 MXU operands."""
    emb_table, w1, b1, w2, b2 = params
    V, E = emb_table.shape
    H = w1.shape[1]
    C = w2.shape[1]
    v_pad = _round_up(V, LANES)
    c_pad = _round_up(C, LANES)

    # Fold Linear1 into the embedding matmul (mean-pool and Linear are both linear).
    # Row 0 (padding_idx) of emb_table is zero -> row 0 of emb_w1 is zero.
    emb_w1 = jnp.dot(emb_table, w1, preferred_element_type=jnp.float32)       # [V, H]
    emb_w1_p = jnp.zeros((v_pad, H), mxu_dtype).at[:V].set(emb_w1.astype(mxu_dtype))
    w2_p = jnp.zeros((H, c_pad), mxu_dtype).at[:, :C].set(w2.astype(mxu_dtype))
    b1_p = b1.reshape(1, H).astype(jnp.float32)
    b2_p = jnp.zeros((1, c_pad), jnp.float32).at[:, :C].set(b2)
    return PreparedParams(emb_w1_p, b1_p, w2_p, b2_p, C)


# -------------------------------------------------------------------------- forward
def basemodel_forward(sentence_ids, sentence_lengths, prepared: PreparedParams,
                      *, block_b=256):
    emb_w1_p, b1_p, w2_p, b2_p, n_classes = prepared
    B, S = sentence_ids.shape
    v_pad, H = emb_w1_p.shape
    c_pad = w2_p.shape[1]

    # reciprocal lengths precomputed (multiply in kernel instead of divide)
    # TODO(synk): zero-length sentences give inf -> NaN rows (matches PyTorch 0/0).
    inv_len = (1.0 / sentence_lengths.astype(jnp.float32)).reshape(B, 1)

    # Batch tiling: near-minimal padding; for large B force >=2 (even) grid steps so
    # the "parallel" batch axis can be split across both v7x TensorCores.
    n_tiles = max(1, _cdiv(B, block_b))
    if B >= 16:
        n_tiles = max(n_tiles, 2)
        n_tiles += n_tiles % 2
    tb = _round_up(_cdiv(B, n_tiles), 8)
    b_pad = tb * n_tiles

    ids = sentence_ids.astype(jnp.int32)
    if b_pad != B:
        ids = jnp.zeros((b_pad, S), jnp.int32).at[:B].set(ids)
        inv_len = jnp.zeros((b_pad, 1), jnp.float32).at[:B].set(inv_len)

    def launch(single_buffer_weights):
        # Constant-index weight blocks do not need double-buffering.
        resident = ({"pipeline_mode": pl.Buffered(1)}
                    if single_buffer_weights else {})
        grid_spec = pltpu.PrefetchScalarGridSpec(
            num_scalar_prefetch=0,
            grid=(n_tiles,),
            in_specs=[
                pl.BlockSpec((tb, S), lambda i: (i, 0)),                   # token ids
                pl.BlockSpec((tb, 1), lambda i: (i, 0)),                   # 1/length
                pl.BlockSpec((v_pad, H), lambda i: (0, 0), **resident),    # emb @ W1
                pl.BlockSpec((1, H), lambda i: (0, 0), **resident),        # b1
                pl.BlockSpec((H, c_pad), lambda i: (0, 0), **resident),    # W2
                pl.BlockSpec((1, c_pad), lambda i: (0, 0), **resident),    # b2
            ],
            out_specs=pl.BlockSpec((tb, c_pad), lambda i: (i, 0)),         # lane-dense
        )
        return pl.pallas_call(
            basemodel_kernel,
            out_shape=jax.ShapeDtypeStruct((b_pad, c_pad), jnp.float32),
            grid_spec=grid_spec,
            compiler_params=pltpu.CompilerParams(
                dimension_semantics=("parallel",),   # batch axis across TCs on v7x
                vmem_limit_bytes=32 * 1024 * 1024,   # safe on v5e/v6e/v7x
            ),
        )(ids, inv_len, emb_w1_p, b1_p, w2_p, b2_p)

    try:
        out = jax.block_until_ready(launch(True))
    except Exception:
        # pl.Buffered(1) not accepted by this jax version / lowering: drop the hint.
        out = jax.block_until_ready(launch(False))

    return out[:B, :n_classes]


# ----------------------------------------------------------------------------- main
if __name__ == "__main__":
    # args: vocab_size=50, embedding_size=32, mlp_units=[32], output_classes=4
    VOCAB, EMBED, HIDDEN, CLASSES = 50, 32, 32, 4
    B, S = 2, 8

    key = jax.random.PRNGKey(0)
    k_params, k_ids = jax.random.split(key)
    params = init_params(k_params, VOCAB, EMBED, HIDDEN, CLASSES)
    prepared = prepare_params(params)   # one-time: W1 fusion + padding + bf16 casts

    # Token ids in [1, VOCAB); positions past each sentence length are padded with 0.
    sentence_ids = jax.random.randint(k_ids, (B, S), 1, VOCAB, dtype=jnp.int32)
    sentence_lengths = jnp.array([8, 5], dtype=jnp.int32)
    pos = jnp.arange(S)[None, :]
    sentence_ids = jnp.where(pos < sentence_lengths[:, None], sentence_ids, 0)

    out = basemodel_forward(sentence_ids, sentence_lengths, prepared)
    out = jax.block_until_ready(out)
    assert out.shape == (B, CLASSES)
    assert bool(jnp.all((out >= 0.0) & (out <= 1.0)))

    # Cross-check against a plain-JAX f32 reference of the same forward pass.
    # MXU operands are bf16 in the kernel, so use a correspondingly relaxed tolerance.
    emb_table, w1, b1, w2, b2 = params
    ref_pooled = jnp.take(emb_table, sentence_ids, axis=0).sum(1) / \
        sentence_lengths.astype(jnp.float32)[:, None]
    ref_h = jnp.maximum(ref_pooled @ w1 + b1, 0.0)
    ref = jax.nn.sigmoid(ref_h @ w2 + b2)
    assert bool(jnp.allclose(out, ref, atol=2e-2, rtol=0.0))

    print("KERNEL_OK")
</pallas_src>

<mosaic_0001>
module attributes {stable_mosaic.version = 11 : i64} {
  func.func @basemodel_kernel(%arg0: i32, %arg1: memref<8x8xi32, #tpu.memory_space<vmem>>, %arg2: memref<8x1xf32, #tpu.memory_space<vmem>>, %arg3: memref<128x32xbf16, #tpu.memory_space<vmem>>, %arg4: memref<1x32xf32, #tpu.memory_space<vmem>>, %arg5: memref<32x128xbf16, #tpu.memory_space<vmem>>, %arg6: memref<1x128xf32, #tpu.memory_space<vmem>>, %arg7: memref<8x128xf32, #tpu.memory_space<vmem>>) attributes {dimension_semantics = [#tpu.dimension_semantics<parallel>], iteration_bounds = array<i64: 1>, scalar_prefetch = 0 : i64, scratch_operands = 0 : i64, tpu.core_type = #tpu.core_type<tc>, window_params = [{transform_indices = @transform_0, window_bounds = array<i64: 8, 8>}, {transform_indices = @transform_1, window_bounds = array<i64: 8, 1>}, {pipeline_mode = #tpu.pipeline_mode<synchronous>, transform_indices = @transform_2, window_bounds = array<i64: 128, 32>}, {pipeline_mode = #tpu.pipeline_mode<synchronous>, transform_indices = @transform_3, window_bounds = array<i64: 1, 32>}, {pipeline_mode = #tpu.pipeline_mode<synchronous>, transform_indices = @transform_4, window_bounds = array<i64: 32, 128>}, {pipeline_mode = #tpu.pipeline_mode<synchronous>, transform_indices = @transform_5, window_bounds = array<i64: 1, 128>}, {transform_indices = @transform_6, window_bounds = array<i64: 8, 128>}]} {
    %c0 = arith.constant 0 : index
    %c0_0 = arith.constant 0 : index
    %0 = vector.load %arg1[%c0, %c0_0] : memref<8x8xi32, #tpu.memory_space<vmem>>, vector<8x8xi32>
    %1 = tpu.iota {dimensions = array<i32: 1>} : vector<8x128xi32>
    %c0_i32 = arith.constant 0 : i32
    %2 = vector.broadcast %c0_i32 : i32 to vector<8x128xi32>
    %3 = vector.extract_strided_slice %0 {offsets = [0, 0], sizes = [8, 1], strides = [1, 1]} : vector<8x8xi32> to vector<8x1xi32>
    %4 = vector.broadcast %3 : vector<8x1xi32> to vector<8x128xi32>
    %5 = arith.cmpi eq, %4, %1 : vector<8x128xi32>
    %6 = arith.extui %5 : vector<8x128xi1> to vector<8x128xi32>
    %7 = arith.addi %2, %6 : vector<8x128xi32>
    %8 = vector.extract_strided_slice %0 {offsets = [0, 1], sizes = [8, 1], strides = [1, 1]} : vector<8x8xi32> to vector<8x1xi32>
    %9 = vector.broadcast %8 : vector<8x1xi32> to vector<8x128xi32>
    %10 = arith.cmpi eq, %9, %1 : vector<8x128xi32>
    %11 = arith.extui %10 : vector<8x128xi1> to vector<8x128xi32>
    %12 = arith.addi %7, %11 : vector<8x128xi32>
    %13 = vector.extract_strided_slice %0 {offsets = [0, 2], sizes = [8, 1], strides = [1, 1]} : vector<8x8xi32> to vector<8x1xi32>
    %14 = vector.broadcast %13 : vector<8x1xi32> to vector<8x128xi32>
    %15 = arith.cmpi eq, %14, %1 : vector<8x128xi32>
    %16 = arith.extui %15 : vector<8x128xi1> to vector<8x128xi32>
    %17 = arith.addi %12, %16 : vector<8x128xi32>
    %18 = vector.extract_strided_slice %0 {offsets = [0, 3], sizes = [8, 1], strides = [1, 1]} : vector<8x8xi32> to vector<8x1xi32>
    %19 = vector.broadcast %18 : vector<8x1xi32> to vector<8x128xi32>
    %20 = arith.cmpi eq, %19, %1 : vector<8x128xi32>
    %21 = arith.extui %20 : vector<8x128xi1> to vector<8x128xi32>
    %22 = arith.addi %17, %21 : vector<8x128xi32>
    %23 = vector.extract_strided_slice %0 {offsets = [0, 4], sizes = [8, 1], strides = [1, 1]} : vector<8x8xi32> to vector<8x1xi32>
    %24 = vector.broadcast %23 : vector<8x1xi32> to vector<8x128xi32>
    %25 = arith.cmpi eq, %24, %1 : vector<8x128xi32>
    %26 = arith.extui %25 : vector<8x128xi1> to vector<8x128xi32>
    %27 = arith.addi %22, %26 : vector<8x128xi32>
    %28 = vector.extract_strided_slice %0 {offsets = [0, 5], sizes = [8, 1], strides = [1, 1]} : vector<8x8xi32> to vector<8x1xi32>
    %29 = vector.broadcast %28 : vector<8x1xi32> to vector<8x128xi32>
    %30 = arith.cmpi eq, %29, %1 : vector<8x128xi32>
    %31 = arith.extui %30 : vector<8x128xi1> to vector<8x128xi32>
    %32 = arith.addi %27, %31 : vector<8x128xi32>
    %33 = vector.extract_strided_slice %0 {offsets = [0, 6], sizes = [8, 1], strides = [1, 1]} : vector<8x8xi32> to vector<8x1xi32>
    %34 = vector.broadcast %33 : vector<8x1xi32> to vector<8x128xi32>
    %35 = arith.cmpi eq, %34, %1 : vector<8x128xi32>
    %36 = arith.extui %35 : vector<8x128xi1> to vector<8x128xi32>
    %37 = arith.addi %32, %36 : vector<8x128xi32>
    %38 = vector.extract_strided_slice %0 {offsets = [0, 7], sizes = [8, 1], strides = [1, 1]} : vector<8x8xi32> to vector<8x1xi32>
    %39 = vector.broadcast %38 : vector<8x1xi32> to vector<8x128xi32>
    %40 = arith.cmpi eq, %39, %1 : vector<8x128xi32>
    %41 = arith.extui %40 : vector<8x128xi1> to vector<8x128xi32>
    %42 = arith.addi %37, %41 : vector<8x128xi32>
    %43 = arith.sitofp %42 : vector<8x128xi32> to vector<8x128xbf16>
    %c0_1 = arith.constant 0 : index
    %c0_2 = arith.constant 0 : index
    %44 = vector.load %arg3[%c0_1, %c0_2] : memref<128x32xbf16, #tpu.memory_space<vmem>>, vector<128x32xbf16>
    %cst = arith.constant dense<0.000000e+00> : vector<8x32xf32>
    %45 = tpu.matmul %43, %44, %cst {dimension_numbers = #tpu.dot_dimension_numbers<[1], [0], [0], [1], [0, 0, 1, 1], [], []>} : vector<8x128xbf16>, vector<128x32xbf16>, vector<8x32xf32> -> vector<8x32xf32>
    %c0_3 = arith.constant 0 : index
    %c0_4 = arith.constant 0 : index
    %46 = vector.load %arg2[%c0_3, %c0_4] : memref<8x1xf32, #tpu.memory_space<vmem>>, vector<8x1xf32>
    %47 = vector.broadcast %46 : vector<8x1xf32> to vector<8x32xf32>
    %48 = arith.mulf %45, %47 : vector<8x32xf32>
    %c0_5 = arith.constant 0 : index
    %c0_6 = arith.constant 0 : index
    %49 = vector.load %arg4[%c0_5, %c0_6] : memref<1x32xf32, #tpu.memory_space<vmem>>, vector<1x32xf32>
    %50 = vector.broadcast %49 : vector<1x32xf32> to vector<8x32xf32>
    %51 = arith.addf %48, %50 : vector<8x32xf32>
    %cst_7 = arith.constant 0.000000e+00 : f32
    %52 = vector.broadcast %cst_7 : f32 to vector<8x32xf32>
    %53 = arith.maximumf %51, %52 : vector<8x32xf32>
    %54 = arith.truncf %53 : vector<8x32xf32> to vector<8x32xbf16>
    %c0_8 = arith.constant 0 : index
    %c0_9 = arith.constant 0 : index
    %55 = vector.load %arg5[%c0_8, %c0_9] : memref<32x128xbf16, #tpu.memory_space<vmem>>, vector<32x128xbf16>
    %cst_10 = arith.constant dense<0.000000e+00> : vector<8x128xf32>
    %56 = tpu.matmul %54, %55, %cst_10 {dimension_numbers = #tpu.dot_dimension_numbers<[1], [0], [0], [1], [0, 0, 1, 1], [], []>} : vector<8x32xbf16>, vector<32x128xbf16>, vector<8x128xf32> -> vector<8x128xf32>
    %c0_11 = arith.constant 0 : index
    %c0_12 = arith.constant 0 : index
    %57 = vector.load %arg6[%c0_11, %c0_12] : memref<1x128xf32, #tpu.memory_space<vmem>>, vector<1x128xf32>
    %58 = vector.broadcast %57 : vector<1x128xf32> to vector<8x128xf32>
    %59 = arith.addf %56, %58 : vector<8x128xf32>
    %60 = arith.negf %59 : vector<8x128xf32>
    %61 = math.exp %60 : vector<8x128xf32>
    %cst_13 = arith.constant 1.000000e+00 : f32
    %62 = vector.broadcast %cst_13 : f32 to vector<8x128xf32>
    %63 = arith.addf %62, %61 : vector<8x128xf32>
    %64 = arith.divf %62, %63 : vector<8x128xf32>
    %c0_14 = arith.constant 0 : index
    %c0_15 = arith.constant 0 : index
    %65 = vector.load %arg7[%c0_14, %c0_15] : memref<8x128xf32, #tpu.memory_space<vmem>>, vector<8x128xf32>
    tpu.vector_store %arg7[%c0_14, %c0_15], %64 {strides = array<i32>} : memref<8x128xf32, #tpu.memory_space<vmem>>, vector<8x128xf32>,
    return
  }
  func.func @transform_0(%arg0: i32) -> (i32, i32) {
    %c0_i32 = arith.constant 0 : i32
    %c0_i32_0 = arith.constant 0 : i32
    return %arg0, %c0_i32 : i32, i32
  }
  func.func @transform_1(%arg0: i32) -> (i32, i32) {
    %c0_i32 = arith.constant 0 : i32
    %c0_i32_0 = arith.constant 0 : i32
    return %arg0, %c0_i32 : i32, i32
  }
  func.func @transform_2(%arg0: i32) -> (i32, i32) {
    %c0_i32 = arith.constant 0 : i32
    %c0_i32_0 = arith.constant 0 : i32
    %c0_i32_1 = arith.constant 0 : i32
    return %c0_i32, %c0_i32_0 : i32, i32
  }
  func.func @transform_3(%arg0: i32) -> (i32, i32) {
    %c0_i32 = arith.constant 0 : i32
    %c0_i32_0 = arith.constant 0 : i32
    %c0_i32_1 = arith.constant 0 : i32
    return %c0_i32, %c0_i32_0 : i32, i32
  }
  func.func @transform_4(%arg0: i32) -> (i32, i32) {
    %c0_i32 = arith.constant 0 : i32
    %c0_i32_0 = arith.constant 0 : i32
    %c0_i32_1 = arith.constant 0 : i32
    return %c0_i32, %c0_i32_0 : i32, i32
  }
  func.func @transform_5(%arg0: i32) -> (i32, i32) {
    %c0_i32 = arith.constant 0 : i32
    %c0_i32_0 = arith.constant 0 : i32
    %c0_i32_1 = arith.constant 0 : i32
    return %c0_i32, %c0_i32_0 : i32, i32
  }
  func.func @transform_6(%arg0: i32) -> (i32, i32) {
    %c0_i32 = arith.constant 0 : i32
    %c0_i32_0 = arith.constant 0 : i32
    return %arg0, %c0_i32 : i32, i32
  }
}

module attributes {stable_mosaic.version = 11 : i64} {
  func.func @basemodel_kernel(%arg0: i32, %arg1: memref<8x8xi32, #tpu.memory_space<vmem>>, %arg2: memref<8x1xf32, #tpu.memory_space<vmem>>, %arg3: memref<128x32xbf16, #tpu.memory_space<vmem>>, %arg4: memref<1x32xf32, #tpu.memory_space<vmem>>, %arg5: memref<32x128xbf16, #tpu.memory_space<vmem>>, %arg6: memref<1x128xf32, #tpu.memory_space<vmem>>, %arg7: memref<8x128xf32, #tpu.memory_space<vmem>>) attributes {dimension_semantics = [#tpu.dimension_semantics<parallel>], iteration_bounds = array<i64: 1>, scalar_prefetch = 0 : i64, scratch_operands = 0 : i64, tpu.core_type = #tpu.core_type<tc>, window_params = [{transform_indices = @transform_0, window_bounds = array<i64: 8, 8>}, {transform_indices = @transform_1, window_bounds = array<i64: 8, 1>}, {pipeline_mode = #tpu.pipeline_mode<synchronous>, transform_indices = @transform_2, window_bounds = array<i64: 128, 32>}, {pipeline_mode = #tpu.pipeline_mode<synchronous>, transform_indices = @transform_3, window_bounds = array<i64: 1, 32>}, {pipeline_mode = #tpu.pipeline_mode<synchronous>, transform_indices = @transform_4, window_bounds = array<i64: 32, 128>}, {pipeline_mode = #tpu.pipeline_mode<synchronous>, transform_indices = @transform_5, window_bounds = array<i64: 1, 128>}, {transform_indices = @transform_6, window_bounds = array<i64: 8, 128>}]} {
    %c0 = arith.constant 0 : index
    %c0_0 = arith.constant 0 : index
    %0 = vector.load %arg1[%c0, %c0_0] : memref<8x8xi32, #tpu.memory_space<vmem>>, vector<8x8xi32>
    %1 = tpu.iota {dimensions = array<i32: 1>} : vector<8x128xi32>
    %c0_i32 = arith.constant 0 : i32
    %2 = vector.broadcast %c0_i32 : i32 to vector<8x128xi32>
    %3 = vector.extract_strided_slice %0 {offsets = [0, 0], sizes = [8, 1], strides = [1, 1]} : vector<8x8xi32> to vector<8x1xi32>
    %4 = vector.broadcast %3 : vector<8x1xi32> to vector<8x128xi32>
    %5 = arith.cmpi eq, %4, %1 : vector<8x128xi32>
    %6 = arith.extui %5 : vector<8x128xi1> to vector<8x128xi32>
    %7 = arith.addi %2, %6 : vector<8x128xi32>
    %8 = vector.extract_strided_slice %0 {offsets = [0, 1], sizes = [8, 1], strides = [1, 1]} : vector<8x8xi32> to vector<8x1xi32>
    %9 = vector.broadcast %8 : vector<8x1xi32> to vector<8x128xi32>
    %10 = arith.cmpi eq, %9, %1 : vector<8x128xi32>
    %11 = arith.extui %10 : vector<8x128xi1> to vector<8x128xi32>
    %12 = arith.addi %7, %11 : vector<8x128xi32>
    %13 = vector.extract_strided_slice %0 {offsets = [0, 2], sizes = [8, 1], strides = [1, 1]} : vector<8x8xi32> to vector<8x1xi32>
    %14 = vector.broadcast %13 : vector<8x1xi32> to vector<8x128xi32>
    %15 = arith.cmpi eq, %14, %1 : vector<8x128xi32>
    %16 = arith.extui %15 : vector<8x128xi1> to vector<8x128xi32>
    %17 = arith.addi %12, %16 : vector<8x128xi32>
    %18 = vector.extract_strided_slice %0 {offsets = [0, 3], sizes = [8, 1], strides = [1, 1]} : vector<8x8xi32> to vector<8x1xi32>
    %19 = vector.broadcast %18 : vector<8x1xi32> to vector<8x128xi32>
    %20 = arith.cmpi eq, %19, %1 : vector<8x128xi32>
    %21 = arith.extui %20 : vector<8x128xi1> to vector<8x128xi32>
    %22 = arith.addi %17, %21 : vector<8x128xi32>
    %23 = vector.extract_strided_slice %0 {offsets = [0, 4], sizes = [8, 1], strides = [1, 1]} : vector<8x8xi32> to vector<8x1xi32>
    %24 = vector.broadcast %23 : vector<8x1xi32> to vector<8x128xi32>
    %25 = arith.cmpi eq, %24, %1 : vector<8x128xi32>
    %26 = arith.extui %25 : vector<8x128xi1> to vector<8x128xi32>
    %27 = arith.addi %22, %26 : vector<8x128xi32>
    %28 = vector.extract_strided_slice %0 {offsets = [0, 5], sizes = [8, 1], strides = [1, 1]} : vector<8x8xi32> to vector<8x1xi32>
    %29 = vector.broadcast %28 : vector<8x1xi32> to vector<8x128xi32>
    %30 = arith.cmpi eq, %29, %1 : vector<8x128xi32>
    %31 = arith.extui %30 : vector<8x128xi1> to vector<8x128xi32>
    %32 = arith.addi %27, %31 : vector<8x128xi32>
    %33 = vector.extract_strided_slice %0 {offsets = [0, 6], sizes = [8, 1], strides = [1, 1]} : vector<8x8xi32> to vector<8x1xi32>
    %34 = vector.broadcast %33 : vector<8x1xi32> to vector<8x128xi32>
    %35 = arith.cmpi eq, %34, %1 : vector<8x128xi32>
    %36 = arith.extui %35 : vector<8x128xi1> to vector<8x128xi32>
    %37 = arith.addi %32, %36 : vector<8x128xi32>
    %38 = vector.extract_strided_slice %0 {offsets = [0, 7], sizes = [8, 1], strides = [1, 1]} : vector<8x8xi32> to vector<8x1xi32>
    %39 = vector.broadcast %38 : vector<8x1xi32> to vector<8x128xi32>
    %40 = arith.cmpi eq, %39, %1 : vector<8x128xi32>
    %41 = arith.extui %40 : vector<8x128xi1> to vector<8x128xi32>
    %42 = arith.addi %37, %41 : vector<8x128xi32>
    %43 = arith.sitofp %42 : vector<8x128xi32> to vector<8x128xbf16>
    %c0_1 = arith.constant 0 : index
    %c0_2 = arith.constant 0 : index
    %44 = vector.load %arg3[%c0_1, %c0_2] : memref<128x32xbf16, #tpu.memory_space<vmem>>, vector<128x32xbf16>
    %cst = arith.constant dense<0.000000e+00> : vector<8x32xf32>
    %45 = tpu.matmul %43, %44, %cst {dimension_numbers = #tpu.dot_dimension_numbers<[1], [0], [0], [1], [0, 0, 1, 1], [], []>} : vector<8x128xbf16>, vector<128x32xbf16>, vector<8x32xf32> -> vector<8x32xf32>
    %c0_3 = arith.constant 0 : index
    %c0_4 = arith.constant 0 : index
    %46 = vector.load %arg2[%c0_3, %c0_4] : memref<8x1xf32, #tpu.memory_space<vmem>>, vector<8x1xf32>
    %47 = vector.broadcast %46 : vector<8x1xf32> to vector<8x32xf32>
    %48 = arith.mulf %45, %47 : vector<8x32xf32>
    %c0_5 = arith.constant 0 : index
    %c0_6 = arith.constant 0 : index
    %49 = vector.load %arg4[%c0_5, %c0_6] : memref<1x32xf32, #tpu.memory_space<vmem>>, vector<1x32xf32>
    %50 = vector.broadcast %49 : vector<1x32xf32> to vector<8x32xf32>
    %51 = arith.addf %48, %50 : vector<8x32xf32>
    %cst_7 = arith.constant 0.000000e+00 : f32
    %52 = vector.broadcast %cst_7 : f32 to vector<8x32xf32>
    %53 = arith.maximumf %51, %52 : vector<8x32xf32>
    %54 = arith.truncf %53 : vector<8x32xf32> to vector<8x32xbf16>
    %c0_8 = arith.constant 0 : index
    %c0_9 = arith.constant 0 : index
    %55 = vector.load %arg5[%c0_8, %c0_9] : memref<32x128xbf16, #tpu.memory_space<vmem>>, vector<32x128xbf16>
    %cst_10 = arith.constant dense<0.000000e+00> : vector<8x128xf32>
    %56 = tpu.matmul %54, %55, %cst_10 {dimension_numbers = #tpu.dot_dimension_numbers<[1], [0], [0], [1], [0, 0, 1, 1], [], []>} : vector<8x32xbf16>, vector<32x128xbf16>, vector<8x128xf32> -> vector<8x128xf32>
    %c0_11 = arith.constant 0 : index
    %c0_12 = arith.constant 0 : index
    %57 = vector.load %arg6[%c0_11, %c0_12] : memref<1x128xf32, #tpu.memory_space<vmem>>, vector<1x128xf32>
    %58 = vector.broadcast %57 : vector<1x128xf32> to vector<8x128xf32>
    %59 = arith.addf %56, %58 : vector<8x128xf32>
    %60 = arith.negf %59 : vector<8x128xf32>
    %61 = math.exp %60 : vector<8x128xf32>
    %cst_13 = arith.constant 1.000000e+00 : f32
    %62 = vector.broadcast %cst_13 : f32 to vector<8x128xf32>
    %63 = arith.addf %62, %61 : vector<8x128xf32>
    %64 = arith.divf %62, %63 : vector<8x128xf32>
    %c0_14 = arith.constant 0 : index
    %c0_15 = arith.constant 0 : index
    %65 = vector.load %arg7[%c0_14, %c0_15] : memref<8x128xf32, #tpu.memory_space<vmem>>, vector<8x128xf32>
    tpu.vector_store %arg7[%c0_14, %c0_15], %64 {strides = array<i32>} : memref<8x128xf32, #tpu.memory_space<vmem>>, vector<8x128xf32>,
    return
  }
  func.func @transform_0(%arg0: i32) -> (i32, i32) {
    %c0_i32 = arith.constant 0 : i32
    %c0_i32_0 = arith.constant 0 : i32
    return %arg0, %c0_i32 : i32, i32
  }
  func.func @transform_1(%arg0: i32) -> (i32, i32) {
    %c0_i32 = arith.constant 0 : i32
    %c0_i32_0 = arith.constant 0 : i32
    return %arg0, %c0_i32 : i32, i32
  }
  func.func @transform_2(%arg0: i32) -> (i32, i32) {
    %c0_i32 = arith.constant 0 : i32
    %c0_i32_0 = arith.constant 0 : i32
    %c0_i32_1 = arith.constant 0 : i32
    return %c0_i32, %c0_i32_0 : i32, i32
  }
  func.func @transform_3(%arg0: i32) -> (i32, i32) {
    %c0_i32 = arith.constant 0 : i32
    %c0_i32_0 = arith.constant 0 : i32
    %c0_i32_1 = arith.constant 0 : i32
    return %c0_i32, %c0_i32_0 : i32, i32
  }
  func.func @transform_4(%arg0: i32) -> (i32, i32) {
    %c0_i32 = arith.constant 0 : i32
    %c0_i32_0 = arith.constant 0 : i32
    %c0_i32_1 = arith.constant 0 : i32
    return %c0_i32, %c0_i32_0 : i32, i32
  }
  func.func @transform_5(%arg0: i32) -> (i32, i32) {
    %c0_i32 = arith.constant 0 : i32
    %c0_i32_0 = arith.constant 0 : i32
    %c0_i32_1 = arith.constant 0 : i32
    return %c0_i32, %c0_i32_0 : i32, i32
  }
  func.func @transform_6(%arg0: i32) -> (i32, i32) {
    %c0_i32 = arith.constant 0 : i32
    %c0_i32_0 = arith.constant 0 : i32
    return %arg0, %c0_i32 : i32, i32
  }
}

</mosaic_0001>

<llo_original>
// kernel: tpu_custom_call.1
$region0: #{tpu_custom_call.1}
  #allocation0 [shape = 'u32[]', space=smem, size = 0x4, offset = 0x4, fixed_abs, tag = 'smem constant byte address 0x4 - core index']
  #allocation1 [shape = 'u32[144,128]{1,0:T(1,128)}', space=vmem, size = 0x12000, scoped, tag = 'internal scratch']
  %s0 = inlined_call_operand.vmem [shape: s32[8,8], index: 0, kind: input, shape index: {}]
  %s1 = inlined_call_operand.vmem [shape: f32[8,1], index: 1, kind: input, shape index: {}]
  %s2 = inlined_call_operand.vmem [shape: bf16[128,32], index: 2, kind: input, shape index: {}]
  %s3 = inlined_call_operand.vmem [shape: f32[1,32], index: 3, kind: input, shape index: {}]
  %s4 = inlined_call_operand.vmem [shape: bf16[32,128], index: 4, kind: input, shape index: {}]
  %s5 = inlined_call_operand.vmem [shape: f32[1,128], index: 5, kind: input, shape index: {}]
  %s6 = inlined_call_operand.hbm [shape: f32[8,128], index: 6, kind: output, shape index: {}]
  %s7 = sld [smem:[#allocation0]]
  $region34: #{tpu_custom_call.1} parent=0
    _
  %s9 = ssub.s32 1, %s7
  %s10 = scalar_select 0, %s9, %s7
  $region1: #{tpu_custom_call.1} parent=0
    #allocation2 [shape = 'u8[4096]{0}', space=vmem, size = 0x1000, scoped, tag = 'output window, operand 0, single buffered']
    #allocation3 [shape = 's32[1]{0}', space=sflag, size = 0x4, scoped, tag = 'scoped memory for tpu_custom_call.1']
    %11 = vsyncpa [#allocation3], 0
    // Predicated region
    $region2: #{tpu_custom_call.1} parent=1 // pred_check
      _
    $region3: #{tpu_custom_call.1} parent=1 // pred_check_branch
      %13 = sbr.rel (0) target = $region5
    $region4: #{tpu_custom_call.1} parent=1 // pred_region
      _
    $region5: #{tpu_custom_call.1} parent=1 // pred_fallthru
      _
    // Predicated region
    $region6: #{tpu_custom_call.1} parent=1 // pred_check
      _
    $region7: #{tpu_custom_call.1} parent=1 // pred_check_branch
      %15 = sbr.rel (0) target = $region9
    $region8: #{tpu_custom_call.1} parent=1 // pred_region
      _
    $region9: #{tpu_custom_call.1} parent=1 // pred_fallthru
      _
    // Predicated region
    $region10: #{tpu_custom_call.1} parent=1 // pred_check
      _
    $region11: #{tpu_custom_call.1} parent=1 // pred_check_branch
      %17 = sbr.rel (0) target = $region13
    $region12: #{tpu_custom_call.1} parent=1 // pred_region
      _
    $region13: #{tpu_custom_call.1} parent=1 // pred_fallthru
      _
    // Predicated region
    $region14: #{tpu_custom_call.1} parent=1 // pred_check
      _
    $region15: #{tpu_custom_call.1} parent=1 // pred_check_branch
      %19 = sbr.rel (0) target = $region17
    $region16: #{tpu_custom_call.1} parent=1 // pred_region
      _
    $region17: #{tpu_custom_call.1} parent=1 // pred_fallthru
      _
    // Predicated region
    $region18: #{tpu_custom_call.1} parent=1 // pred_check
      _
    $region19: #{tpu_custom_call.1} parent=1 // pred_check_branch
      %21 = sbr.rel (0) target = $region21
    $region20: #{tpu_custom_call.1} parent=1 // pred_region
      _
    $region21: #{tpu_custom_call.1} parent=1 // pred_fallthru
      _
    // Predicated region
    $region22: #{tpu_custom_call.1} parent=1 // pred_check
      _
    $region23: #{tpu_custom_call.1} parent=1 // pred_check_branch
      %23 = sbr.rel (0) target = $region25
    $region24: #{tpu_custom_call.1} parent=1 // pred_region
      _
    $region25: #{tpu_custom_call.1} parent=1 // pred_fallthru
      _
    %v25 = vld [vmem:[%s0] sm:$0xff]
    %v26 = vlaneseq
    %v27 = vand.u32 %v26, 127
    %28 = vset.pattern.permute.xlu0 0
    %29 = vperm.xlu0 %28, %v25
    %v30 = vpop.permute.xlu0 %29
    %vm31 = vcmp.eq.s32.totalorder %v30, %v27
    %v32 = vsel %vm31, 1, 0
    %33 = vset.pattern.permute.xlu0 1
    %34 = vperm.xlu0 %33, %v25
    %v35 = vpop.permute.xlu0 %34
    %vm36 = vcmp.eq.s32.totalorder %v35, %v27
    %v37 = vsel %vm36, 1, 0
    %v38 = vadd.s32 %v32, %v37
    %39 = vset.pattern.permute.xlu0 2
    %40 = vperm.xlu0 %39, %v25
    %v41 = vpop.permute.xlu0 %40
    %vm42 = vcmp.eq.s32.totalorder %v41, %v27
    %v43 = vsel %vm42, 1, 0
    %v44 = vadd.s32 %v38, %v43
    %45 = vset.pattern.permute.xlu0 3
    %46 = vperm.xlu0 %45, %v25
    %v47 = vpop.permute.xlu0 %46
    %vm48 = vcmp.eq.s32.totalorder %v47, %v27
    %v49 = vsel %vm48, 1, 0
    %v50 = vadd.s32 %v44, %v49
    %51 = vset.pattern.permute.xlu0 4
    %52 = vperm.xlu0 %51, %v25
    %v53 = vpop.permute.xlu0 %52
    %vm54 = vcmp.eq.s32.totalorder %v53, %v27
    %v55 = vsel %vm54, 1, 0
    %v56 = vadd.s32 %v50, %v55
    %57 = vset.pattern.permute.xlu0 5
    %58 = vperm.xlu0 %57, %v25
    %v59 = vpop.permute.xlu0 %58
    %vm60 = vcmp.eq.s32.totalorder %v59, %v27
    %v61 = vsel %vm60, 1, 0
    %v62 = vadd.s32 %v56, %v61
    %63 = vset.pattern.permute.xlu0 6
    %64 = vperm.xlu0 %63, %v25
    %v65 = vpop.permute.xlu0 %64
    %vm66 = vcmp.eq.s32.totalorder %v65, %v27
    %v67 = vsel %vm66, 1, 0
    %v68 = vadd.s32 %v62, %v67
    %69 = vset.pattern.permute.xlu0 7
    %70 = vperm.xlu0 %69, %v25
    %v71 = vpop.permute.xlu0 %70
    %vm72 = vcmp.eq.s32.totalorder %v71, %v27
    %v73 = vsel %vm72, 1, 0
    %v74 = vadd.s32 %v68, %v73
    %v75 = vcvt.s32.f32 %v74
    %v76 = vpack.c.bf16 %v75, %v75
    %v77 = vld [vmem:[%s2] sm:$0xf]
    %v78 = vld [vmem:[%s2 + $0x4] sm:$0xf]
    %v79 = vld [vmem:[%s2 + $0x8] sm:$0xf]
    %v80 = vld [vmem:[%s2 + $0xc] sm:$0xf]
    %v81 = vld [vmem:[%s2 + $0x10] sm:$0xf]
    %v82 = vld [vmem:[%s2 + $0x14] sm:$0xf]
    %v83 = vld [vmem:[%s2 + $0x18] sm:$0xf]
    %v84 = vld [vmem:[%s2 + $0x1c] sm:$0xf]
    %v85 = vld [vmem:[%s2 + $0x20] sm:$0xf]
    %v86 = vld [vmem:[%s2 + $0x24] sm:$0xf]
    %v87 = vld [vmem:[%s2 + $0x28] sm:$0xf]
    %v88 = vld [vmem:[%s2 + $0x2c] sm:$0xf]
    %v89 = vld [vmem:[%s2 + $0x30] sm:$0xf]
    %v90 = vld [vmem:[%s2 + $0x34] sm:$0xf]
    %v91 = vld [vmem:[%s2 + $0x38] sm:$0xf]
    %v92 = vld [vmem:[%s2 + $0x3c] sm:$0xf]
    %v109 = vunpack.c.l.b16 %v77
    %v110 = vunpack.c.l.b16 %v78
    %v111 = vunpack.c.l.b16 %v79
    %v112 = vunpack.c.l.b16 %v80
    %v113 = vunpack.c.l.b16 %v81
    %v114 = vunpack.c.l.b16 %v82
    %v115 = vunpack.c.l.b16 %v83
    %v116 = vunpack.c.l.b16 %v84
    %v117 = vunpack.c.l.b16 %v85
    %v118 = vunpack.c.l.b16 %v86
    %v119 = vunpack.c.l.b16 %v87
    %v120 = vunpack.c.l.b16 %v88
    %v121 = vunpack.c.l.b16 %v89
    %v122 = vunpack.c.l.b16 %v90
    %v123 = vunpack.c.l.b16 %v91
    %v124 = vunpack.c.l.b16 %v92
    %v125 = vpack.c.b16 %v110, %v109
    %v126 = vpack.c.b16 %v112, %v111
    %v127 = vpack.c.b16 %v114, %v113
    %v128 = vpack.c.b16 %v116, %v115
    %v129 = vpack.c.b16 %v118, %v117
    %v130 = vpack.c.b16 %v120, %v119
    %v131 = vpack.c.b16 %v122, %v121
    %v132 = vpack.c.b16 %v124, %v123
    %141 = vmatprep.subr.bf16.mxu0 0
    %142 = vmatpush1.bf16.msra.mxu0 %v132
    %143 = vmatprep.subr.bf16.mxu0 0
    %144 = vmatpush1.bf16.msra.mxu0 %v131
    %145 = vmatprep.subr.bf16.mxu0 0
    %146 = vmatpush1.bf16.msra.mxu0 %v130
    %147 = vmatprep.subr.bf16.mxu0 0
    %148 = vmatpush1.bf16.msra.mxu0 %v129
    %149 = vmatprep.subr.bf16.mxu0 0
    %150 = vmatpush1.bf16.msra.mxu0 %v128
    %151 = vmatprep.subr.bf16.mxu0 0
    %152 = vmatpush1.bf16.msra.mxu0 %v127
    %153 = vmatprep.subr.bf16.mxu0 0
    %154 = vmatpush1.bf16.msra.mxu0 %v126
    %155 = vmatprep.subr.bf16.mxu0 0
    %156 = vmatpush1.bf16.msra.mxu0 %v125
    %157 = vmatprep.subr.bf16.mxu0 0
    %158 = vmatpush2.bf16.msra.mxu0 0
    %159 = vmatprep.subr.bf16.mxu0 0
    %160 = vmatpush2.bf16.msra.mxu0 0
    %161 = vmatprep.subr.bf16.mxu0 0
    %162 = vmatpush2.bf16.msra.mxu0 0
    %163 = vmatprep.subr.bf16.mxu0 0
    %164 = vmatpush2.bf16.msra.mxu0 0
    %165 = vmatprep.subr.bf16.mxu0 0
    %166 = vmatpush2.bf16.msra.mxu0 0
    %167 = vmatprep.subr.bf16.mxu0 0
    %168 = vmatpush2.bf16.msra.mxu0 0
    %169 = vmatprep.subr.bf16.mxu0 0
    %170 = vmatpush2.bf16.msra.mxu0 0
    %171 = vmatprep.subr.bf16.mxu0 0
    %172 = vmatpush2.bf16.msra.mxu0 0
    %173 = vmatprep.mubr.bf16.mxu0 0
    %174 = vmatmul.mubr.bf16.gmra.mxu0 %v76
    %v175 = vpop.f32.mrf.mxu0
    %v176 = vadd.f32 0.0, %v175
    %v177 = vpop.f32.mrf.mxu0
    %v178 = vpop.f32.mrf.mxu0
    %v179 = vpop.f32.mrf.mxu0
    %180 = vdwg.mxu0
    %v181 = vld [vmem:[%s1] sm:$0xff]
    %183 = vset.pattern.permute.xlu0 0
    %184 = vperm.xlu0 %183, %v181
    %v185 = vpop.permute.xlu0 %184
    %v187 = vmul.f32 %v176, %v185
    %v188 = vld [vmem:[%s3] sm:$0x1]
    %v190 = vlaneseq
    %v191 = vshrl.u32 %v190, 7
    %v192 = vsub.s32 0, %v191
    %v193 = vrot.slane %v188, %v192
    %v195 = vadd.f32 %v187, %v193
    %v196 = vmax.f32 %v195, 0.0
    %v197 = vpack.c.bf16 %v196, %v196
    %v198 = vld [vmem:[%s4] sm:$0xf]
    %v199 = vld [vmem:[%s4 + $0x4] sm:$0xf]
    %v200 = vld [vmem:[%s4 + $0x8] sm:$0xf]
    %v201 = vld [vmem:[%s4 + $0xc] sm:$0xf]
    %v202 = vld [vmem:[%s5] sm:$0x1]
    %v204 = vlaneseq
    %v205 = vshrl.u32 %v204, 7
    %v206 = vsub.s32 0, %v205
    %v207 = vrot.slane %v202, %v206
    %v213 = vunpack.c.l.b16 %v198
    %v214 = vunpack.c.l.b16 %v199
    %v215 = vunpack.c.l.b16 %v200
    %v216 = vunpack.c.l.b16 %v201
    %v217 = vpack.c.b16 %v214, %v213
    %v218 = vpack.c.b16 %v216, %v215
    %vm221 = vcmask 261120
    %v223 = vsel %vm221, %v197, 0
    %225 = vmatprep.subr.bf16.mxu0 0
    %226 = vmatpush1.bf16.msra.mxu0 0
    %227 = vmatprep.subr.bf16.mxu0 0
    %228 = vmatpush1.bf16.msra.mxu0 0
    %229 = vmatprep.subr.bf16.mxu0 0
    %230 = vmatpush1.bf16.msra.mxu0 0
    %231 = vmatprep.subr.bf16.mxu0 0
    %232 = vmatpush1.bf16.msra.mxu0 0
    %233 = vmatprep.subr.bf16.mxu0 0
    %234 = vmatpush1.bf16.msra.mxu0 0
    %235 = vmatprep.subr.bf16.mxu0 0
    %236 = vmatpush1.bf16.msra.mxu0 0
    %237 = vmatprep.subr.bf16.mxu0 0
    %238 = vmatpush1.bf16.msra.mxu0 %v218
    %239 = vmatprep.subr.bf16.mxu0 0
    %240 = vmatpush1.bf16.msra.mxu0 %v217
    %241 = vmatprep.subr.bf16.mxu0 0
    %242 = vmatpush2.bf16.msra.mxu0 0
    %243 = vmatprep.subr.bf16.mxu0 0
    %244 = vmatpush2.bf16.msra.mxu0 0
    %245 = vmatprep.subr.bf16.mxu0 0
    %246 = vmatpush2.bf16.msra.mxu0 0
    %247 = vmatprep.subr.bf16.mxu0 0
    %248 = vmatpush2.bf16.msra.mxu0 0
    %249 = vmatprep.subr.bf16.mxu0 0
    %250 = vmatpush2.bf16.msra.mxu0 0
    %251 = vmatprep.subr.bf16.mxu0 0
    %252 = vmatpush2.bf16.msra.mxu0 0
    %253 = vmatprep.subr.bf16.mxu0 0
    %254 = vmatpush2.bf16.msra.mxu0 0
    %255 = vmatprep.subr.bf16.mxu0 0
    %256 = vmatpush2.bf16.msra.mxu0 0
    %257 = vmatprep.mubr.bf16.mxu0 0
    %258 = vmatmul.mubr.bf16.gmra.mxu0 %v223
    %v259 = vpop.f32.mrf.mxu0
    %v260 = vadd.f32 %v207, %v259
    %v261 = vpop.f32.mrf.mxu0
    %v262 = vpop.f32.mrf.mxu0
    %v263 = vpop.f32.mrf.mxu0
    %264 = vdwg.mxu0
    %v265 = vxor.u32 %v260, 2147483648
    %v266 = vmul.f32 %v265, 1.442695
    %v267 = vpow.pop %v266
    %v268 = vadd.f32 %v267, 1.0
    %v269 = vrcp.pop %v268
    %v270 = vmul.f32 1.0, %v269
    %271 = vst [vmem:[#allocation2] sm:$0xff] %v270
    // Predicated region
    $region26: #{tpu_custom_call.1} parent=1 // pred_check
      _
    $region27: #{tpu_custom_call.1} parent=1 // pred_check_branch
      %273 = sbr.rel (0) target = $region29
    $region28: #{tpu_custom_call.1} parent=1 // pred_region
      %s275 = ssub.s32 128, 128
      %276 = vsyncadd [#allocation3], %s275
      %s278 = sshll.u32 [#allocation2], 4
      %s279 = int_to_ptr.vmem [resolvable:$true] %s278
      %281 = dma.vmem_to_hbm [thread:$0]  %s279, 128, %s6, [#allocation3]
    $region29: #{tpu_custom_call.1} parent=1 // pred_fallthru
      _
    // Predicated region
    $region30: #{tpu_custom_call.1} parent=1 // pred_check
      _
    $region31: #{tpu_custom_call.1} parent=1 // pred_check_branch
      %283 = sbr.rel (0) target = $region33
    $region32: #{tpu_custom_call.1} parent=1 // pred_region
      %284 = dma.done [#allocation3], 128
    $region33: #{tpu_custom_call.1} parent=1 // pred_fallthru
      _
    %285 = vsyncpa [#allocation3], 1

// kernel: tpu_custom_call.1
$region0: #{tpu_custom_call.1}
  #allocation0 [shape = 'u32[]', space=smem, size = 0x4, offset = 0x4, fixed_abs, tag = 'smem constant byte address 0x4 - core index']
  #allocation1 [shape = 'u32[144,128]{1,0:T(1,128)}', space=vmem, size = 0x12000, scoped, tag = 'internal scratch']
  %s0 = inlined_call_operand.vmem [shape: s32[8,8], index: 0, kind: input, shape index: {}]
  %s1 = inlined_call_operand.vmem [shape: f32[8,1], index: 1, kind: input, shape index: {}]
  %s2 = inlined_call_operand.vmem [shape: bf16[128,32], index: 2, kind: input, shape index: {}]
  %s3 = inlined_call_operand.vmem [shape: f32[1,32], index: 3, kind: input, shape index: {}]
  %s4 = inlined_call_operand.vmem [shape: bf16[32,128], index: 4, kind: input, shape index: {}]
  %s5 = inlined_call_operand.vmem [shape: f32[1,128], index: 5, kind: input, shape index: {}]
  %s6 = inlined_call_operand.hbm [shape: f32[8,128], index: 6, kind: output, shape index: {}]
  %s7 = sld [smem:[#allocation0]]
  $region34: #{tpu_custom_call.1} parent=0
    _
  %s9 = ssub.s32 1, %s7
  %s10 = scalar_select 0, %s9, %s7
  $region1: #{tpu_custom_call.1} parent=0
    #allocation2 [shape = 'u8[4096]{0}', space=vmem, size = 0x1000, scoped, tag = 'output window, operand 0, single buffered']
    #allocation3 [shape = 's32[1]{0}', space=sflag, size = 0x4, scoped, tag = 'scoped memory for tpu_custom_call.1']
    %11 = vsyncpa [#allocation3], 0
    // Predicated region
    $region2: #{tpu_custom_call.1} parent=1 // pred_check
      _
    $region3: #{tpu_custom_call.1} parent=1 // pred_check_branch
      %13 = sbr.rel (0) target = $region5
    $region4: #{tpu_custom_call.1} parent=1 // pred_region
      _
    $region5: #{tpu_custom_call.1} parent=1 // pred_fallthru
      _
    // Predicated region
    $region6: #{tpu_custom_call.1} parent=1 // pred_check
      _
    $region7: #{tpu_custom_call.1} parent=1 // pred_check_branch
      %15 = sbr.rel (0) target = $region9
    $region8: #{tpu_custom_call.1} parent=1 // pred_region
      _
    $region9: #{tpu_custom_call.1} parent=1 // pred_fallthru
      _
    // Predicated region
    $region10: #{tpu_custom_call.1} parent=1 // pred_check
      _
    $region11: #{tpu_custom_call.1} parent=1 // pred_check_branch
      %17 = sbr.rel (0) target = $region13
    $region12: #{tpu_custom_call.1} parent=1 // pred_region
      _
    $region13: #{tpu_custom_call.1} parent=1 // pred_fallthru
      _
    // Predicated region
    $region14: #{tpu_custom_call.1} parent=1 // pred_check
      _
    $region15: #{tpu_custom_call.1} parent=1 // pred_check_branch
      %19 = sbr.rel (0) target = $region17
    $region16: #{tpu_custom_call.1} parent=1 // pred_region
      _
    $region17: #{tpu_custom_call.1} parent=1 // pred_fallthru
      _
    // Predicated region
    $region18: #{tpu_custom_call.1} parent=1 // pred_check
      _
    $region19: #{tpu_custom_call.1} parent=1 // pred_check_branch
      %21 = sbr.rel (0) target = $region21
    $region20: #{tpu_custom_call.1} parent=1 // pred_region
      _
    $region21: #{tpu_custom_call.1} parent=1 // pred_fallthru
      _
    // Predicated region
    $region22: #{tpu_custom_call.1} parent=1 // pred_check
      _
    $region23: #{tpu_custom_call.1} parent=1 // pred_check_branch
      %23 = sbr.rel (0) target = $region25
    $region24: #{tpu_custom_call.1} parent=1 // pred_region
      _
    $region25: #{tpu_custom_call.1} parent=1 // pred_fallthru
      _
    %v25 = vld [vmem:[%s0] sm:$0xff]
    %v26 = vlaneseq
    %v27 = vand.u32 %v26, 127
    %28 = vset.pattern.permute.xlu0 0
    %29 = vperm.xlu0 %28, %v25
    %v30 = vpop.permute.xlu0 %29
    %vm31 = vcmp.eq.s32.totalorder %v30, %v27
    %v32 = vsel %vm31, 1, 0
    %33 = vset.pattern.permute.xlu0 1
    %34 = vperm.xlu0 %33, %v25
    %v35 = vpop.permute.xlu0 %34
    %vm36 = vcmp.eq.s32.totalorder %v35, %v27
    %v37 = vsel %vm36, 1, 0
    %v38 = vadd.s32 %v32, %v37
    %39 = vset.pattern.permute.xlu0 2
    %40 = vperm.xlu0 %39, %v25
    %v41 = vpop.permute.xlu0 %40
    %vm42 = vcmp.eq.s32.totalorder %v41, %v27
    %v43 = vsel %vm42, 1, 0
    %v44 = vadd.s32 %v38, %v43
    %45 = vset.pattern.permute.xlu0 3
    %46 = vperm.xlu0 %45, %v25
    %v47 = vpop.permute.xlu0 %46
    %vm48 = vcmp.eq.s32.totalorder %v47, %v27
    %v49 = vsel %vm48, 1, 0
    %v50 = vadd.s32 %v44, %v49
    %51 = vset.pattern.permute.xlu0 4
    %52 = vperm.xlu0 %51, %v25
    %v53 = vpop.permute.xlu0 %52
    %vm54 = vcmp.eq.s32.totalorder %v53, %v27
    %v55 = vsel %vm54, 1, 0
    %v56 = vadd.s32 %v50, %v55
    %57 = vset.pattern.permute.xlu0 5
    %58 = vperm.xlu0 %57, %v25
    %v59 = vpop.permute.xlu0 %58
    %vm60 = vcmp.eq.s32.totalorder %v59, %v27
    %v61 = vsel %vm60, 1, 0
    %v62 = vadd.s32 %v56, %v61
    %63 = vset.pattern.permute.xlu0 6
    %64 = vperm.xlu0 %63, %v25
    %v65 = vpop.permute.xlu0 %64
    %vm66 = vcmp.eq.s32.totalorder %v65, %v27
    %v67 = vsel %vm66, 1, 0
    %v68 = vadd.s32 %v62, %v67
    %69 = vset.pattern.permute.xlu0 7
    %70 = vperm.xlu0 %69, %v25
    %v71 = vpop.permute.xlu0 %70
    %vm72 = vcmp.eq.s32.totalorder %v71, %v27
    %v73 = vsel %vm72, 1, 0
    %v74 = vadd.s32 %v68, %v73
    %v75 = vcvt.s32.f32 %v74
    %v76 = vpack.c.bf16 %v75, %v75
    %v77 = vld [vmem:[%s2] sm:$0xf]
    %v78 = vld [vmem:[%s2 + $0x4] sm:$0xf]
    %v79 = vld [vmem:[%s2 + $0x8] sm:$0xf]
    %v80 = vld [vmem:[%s2 + $0xc] sm:$0xf]
    %v81 = vld [vmem:[%s2 + $0x10] sm:$0xf]
    %v82 = vld [vmem:[%s2 + $0x14] sm:$0xf]
    %v83 = vld [vmem:[%s2 + $0x18] sm:$0xf]
    %v84 = vld [vmem:[%s2 + $0x1c] sm:$0xf]
    %v85 = vld [vmem:[%s2 + $0x20] sm:$0xf]
    %v86 = vld [vmem:[%s2 + $0x24] sm:$0xf]
    %v87 = vld [vmem:[%s2 + $0x28] sm:$0xf]
    %v88 = vld [vmem:[%s2 + $0x2c] sm:$0xf]
    %v89 = vld [vmem:[%s2 + $0x30] sm:$0xf]
    %v90 = vld [vmem:[%s2 + $0x34] sm:$0xf]
    %v91 = vld [vmem:[%s2 + $0x38] sm:$0xf]
    %v92 = vld [vmem:[%s2 + $0x3c] sm:$0xf]
    %v109 = vunpack.c.l.b16 %v77
    %v110 = vunpack.c.l.b16 %v78
    %v111 = vunpack.c.l.b16 %v79
    %v112 = vunpack.c.l.b16 %v80
    %v113 = vunpack.c.l.b16 %v81
    %v114 = vunpack.c.l.b16 %v82
    %v115 = vunpack.c.l.b16 %v83
    %v116 = vunpack.c.l.b16 %v84
    %v117 = vunpack.c.l.b16 %v85
    %v118 = vunpack.c.l.b16 %v86
    %v119 = vunpack.c.l.b16 %v87
    %v120 = vunpack.c.l.b16 %v88
    %v121 = vunpack.c.l.b16 %v89
    %v122 = vunpack.c.l.b16 %v90
    %v123 = vunpack.c.l.b16 %v91
    %v124 = vunpack.c.l.b16 %v92
    %v125 = vpack.c.b16 %v110, %v109
    %v126 = vpack.c.b16 %v112, %v111
    %v127 = vpack.c.b16 %v114, %v113
    %v128 = vpack.c.b16 %v116, %v115
    %v129 = vpack.c.b16 %v118, %v117
    %v130 = vpack.c.b16 %v120, %v119
    %v131 = vpack.c.b16 %v122, %v121
    %v132 = vpack.c.b16 %v124, %v123
    %141 = vmatprep.subr.bf16.mxu0 0
    %142 = vmatpush1.bf16.msra.mxu0 %v132
    %143 = vmatprep.subr.bf16.mxu0 0
    %144 = vmatpush1.bf16.msra.mxu0 %v131
    %145 = vmatprep.subr.bf16.mxu0 0
    %146 = vmatpush1.bf16.msra.mxu0 %v130
    %147 = vmatprep.subr.bf16.mxu0 0
    %148 = vmatpush1.bf16.msra.mxu0 %v129
    %149 = vmatprep.subr.bf16.mxu0 0
    %150 = vmatpush1.bf16.msra.mxu0 %v128
    %151 = vmatprep.subr.bf16.mxu0 0
    %152 = vmatpush1.bf16.msra.mxu0 %v127
    %153 = vmatprep.subr.bf16.mxu0 0
    %154 = vmatpush1.bf16.msra.mxu0 %v126
    %155 = vmatprep.subr.bf16.mxu0 0
    %156 = vmatpush1.bf16.msra.mxu0 %v125
    %157 = vmatprep.subr.bf16.mxu0 0
    %158 = vmatpush2.bf16.msra.mxu0 0
    %159 = vmatprep.subr.bf16.mxu0 0
    %160 = vmatpush2.bf16.msra.mxu0 0
    %161 = vmatprep.subr.bf16.mxu0 0
    %162 = vmatpush2.bf16.msra.mxu0 0
    %163 = vmatprep.subr.bf16.mxu0 0
    %164 = vmatpush2.bf16.msra.mxu0 0
    %165 = vmatprep.subr.bf16.mxu0 0
    %166 = vmatpush2.bf16.msra.mxu0 0
    %167 = vmatprep.subr.bf16.mxu0 0
    %168 = vmatpush2.bf16.msra.mxu0 0
    %169 = vmatprep.subr.bf16.mxu0 0
    %170 = vmatpush2.bf16.msra.mxu0 0
    %171 = vmatprep.subr.bf16.mxu0 0
    %172 = vmatpush2.bf16.msra.mxu0 0
    %173 = vmatprep.mubr.bf16.mxu0 0
    %174 = vmatmul.mubr.bf16.gmra.mxu0 %v76
    %v175 = vpop.f32.mrf.mxu0
    %v176 = vadd.f32 0.0, %v175
    %v177 = vpop.f32.mrf.mxu0
    %v178 = vpop.f32.mrf.mxu0
    %v179 = vpop.f32.mrf.mxu0
    %180 = vdwg.mxu0
    %v181 = vld [vmem:[%s1] sm:$0xff]
    %183 = vset.pattern.permute.xlu0 0
    %184 = vperm.xlu0 %183, %v181
    %v185 = vpop.permute.xlu0 %184
    %v187 = vmul.f32 %v176, %v185
    %v188 = vld [vmem:[%s3] sm:$0x1]
    %v190 = vlaneseq
    %v191 = vshrl.u32 %v190, 7
    %v192 = vsub.s32 0, %v191
    %v193 = vrot.slane %v188, %v192
    %v195 = vadd.f32 %v187, %v193
    %v196 = vmax.f32 %v195, 0.0
    %v197 = vpack.c.bf16 %v196, %v196
    %v198 = vld [vmem:[%s4] sm:$0xf]
    %v199 = vld [vmem:[%s4 + $0x4] sm:$0xf]
    %v200 = vld [vmem:[%s4 + $0x8] sm:$0xf]
    %v201 = vld [vmem:[%s4 + $0xc] sm:$0xf]
    %v202 = vld [vmem:[%s5] sm:$0x1]
    %v204 = vlaneseq
    %v205 = vshrl.u32 %v204, 7
    %v206 = vsub.s32 0, %v205
    %v207 = vrot.slane %v202, %v206
    %v213 = vunpack.c.l.b16 %v198
    %v214 = vunpack.c.l.b16 %v199
    %v215 = vunpack.c.l.b16 %v200
    %v216 = vunpack.c.l.b16 %v201
    %v217 = vpack.c.b16 %v214, %v213
    %v218 = vpack.c.b16 %v216, %v215
    %vm221 = vcmask 261120
    %v223 = vsel %vm221, %v197, 0
    %225 = vmatprep.subr.bf16.mxu0 0
    %226 = vmatpush1.bf16.msra.mxu0 0
    %227 = vmatprep.subr.bf16.mxu0 0
    %228 = vmatpush1.bf16.msra.mxu0 0
    %229 = vmatprep.subr.bf16.mxu0 0
    %230 = vmatpush1.bf16.msra.mxu0 0
    %231 = vmatprep.subr.bf16.mxu0 0
    %232 = vmatpush1.bf16.msra.mxu0 0
    %233 = vmatprep.subr.bf16.mxu0 0
    %234 = vmatpush1.bf16.msra.mxu0 0
    %235 = vmatprep.subr.bf16.mxu0 0
    %236 = vmatpush1.bf16.msra.mxu0 0
    %237 = vmatprep.subr.bf16.mxu0 0
    %238 = vmatpush1.bf16.msra.mxu0 %v218
    %239 = vmatprep.subr.bf16.mxu0 0
    %240 = vmatpush1.bf16.msra.mxu0 %v217
    %241 = vmatprep.subr.bf16.mxu0 0
    %242 = vmatpush2.bf16.msra.mxu0 0
    %243 = vmatprep.subr.bf16.mxu0 0
    %244 = vmatpush2.bf16.msra.mxu0 0
    %245 = vmatprep.subr.bf16.mxu0 0
    %246 = vmatpush2.bf16.msra.mxu0 0
    %247 = vmatprep.subr.bf16.mxu0 0
    %248 = vmatpush2.bf16.msra.mxu0 0
    %249 = vmatprep.subr.bf16.mxu0 0
    %250 = vmatpush2.bf16.msra.mxu0 0
    %251 = vmatprep.subr.bf16.mxu0 0
    %252 = vmatpush2.bf16.msra.mxu0 0
    %253 = vmatprep.subr.bf16.mxu0 0
    %254 = vmatpush2.bf16.msra.mxu0 0
    %255 = vmatprep.subr.bf16.mxu0 0
    %256 = vmatpush2.bf16.msra.mxu0 0
    %257 = vmatprep.mubr.bf16.mxu0 0
    %258 = vmatmul.mubr.bf16.gmra.mxu0 %v223
    %v259 = vpop.f32.mrf.mxu0
    %v260 = vadd.f32 %v207, %v259
    %v261 = vpop.f32.mrf.mxu0
    %v262 = vpop.f32.mrf.mxu0
    %v263 = vpop.f32.mrf.mxu0
    %264 = vdwg.mxu0
    %v265 = vxor.u32 %v260, 2147483648
    %v266 = vmul.f32 %v265, 1.442695
    %v267 = vpow.pop %v266
    %v268 = vadd.f32 %v267, 1.0
    %v269 = vrcp.pop %v268
    %v270 = vmul.f32 1.0, %v269
    %271 = vst [vmem:[#allocation2] sm:$0xff] %v270
    // Predicated region
    $region26: #{tpu_custom_call.1} parent=1 // pred_check
      _
    $region27: #{tpu_custom_call.1} parent=1 // pred_check_branch
      %273 = sbr.rel (0) target = $region29
    $region28: #{tpu_custom_call.1} parent=1 // pred_region
      %s275 = ssub.s32 128, 128
      %276 = vsyncadd [#allocation3], %s275
      %s278 = sshll.u32 [#allocation2], 4
      %s279 = int_to_ptr.vmem [resolvable:$true] %s278
      %281 = dma.vmem_to_hbm [thread:$0]  %s279, 128, %s6, [#allocation3]
    $region29: #{tpu_custom_call.1} parent=1 // pred_fallthru
      _
    // Predicated region
    $region30: #{tpu_custom_call.1} parent=1 // pred_check
      _
    $region31: #{tpu_custom_call.1} parent=1 // pred_check_branch
      %283 = sbr.rel (0) target = $region33
    $region32: #{tpu_custom_call.1} parent=1 // pred_region
      %284 = dma.done [#allocation3], 128
    $region33: #{tpu_custom_call.1} parent=1 // pred_fallthru
      _
    %285 = vsyncpa [#allocation3], 1

</llo_original>
